<compile_context>
chip_gen: v6e
topology: v6e:2x2x1
jax: 0.10.0
libtpu: 0.0.40
codegen_flags: <defaults>
</compile_context>

<pallas_src>
import jax
import jax.numpy as jnp
from jax import lax
from jax.experimental import pallas as pl
from jax.experimental.pallas import tpu as pltpu

_EPS = 1e-8


def _layer_norm_kernel(x_ref, gamma_ref, beta_ref, o_ref):
    # x_ref: (tb, C, tile_t) block in the native NCT layout.
    # gamma_ref / beta_ref: (1, C, 1) fp32, broadcast over batch and lanes.
    x = x_ref[...].astype(jnp.float32)                       # (tb, C, tile_t)
    inv_c = jnp.float32(1.0 / x.shape[1])
    s = jnp.sum(x, axis=1, keepdims=True)                    # (tb, 1, tile_t)
    sq = jnp.sum(x * x, axis=1, keepdims=True)               # fused 2nd moment
    mean = s * inv_c
    var = jnp.maximum(sq * inv_c - mean * mean, 0.0)         # biased, like torch
    inv = lax.rsqrt(var + _EPS)                              # eps = 1e-8
    y = (x - mean) * inv * gamma_ref[...] + beta_ref[...]
    o_ref[...] = y.astype(o_ref.dtype)


def _cdiv(a: int, b: int) -> int:
    return -(-a // b)


def _tpu_vmem_capacity() -> int:
    try:
        info = pltpu.get_tpu_info()
        return int(getattr(info, "vmem_capacity_bytes", 128 << 20))
    except Exception:
        return 128 << 20


def _target_tile_bytes(vmem_capacity: int) -> int:
    # v7x (64 MiB VMEM, ~3.2 TB/s HBM): per-step overhead looms largest ->
    # bigger tiles.  v5e/v6e (128 MiB VMEM): ~3 MiB already >90% of roofline.
    if vmem_capacity <= (64 << 20):
        return 4 << 20
    return 3 << 20


def _pick_tiles(B: int, C: int, T: int, itemsize: int, target_bytes: int):
    """Choose (tile_b, tile_t) for a (tile_b, C, tile_t) block."""
    per_elem = C * T * itemsize
    # Each DMA row along T should be a few KiB contiguous (>=2 KiB), lane-aligned.
    row_floor = max(128, _cdiv(2048, itemsize * 128) * 128)  # 512 f32, 1024 bf16

    if per_elem <= target_bytes:
        # Short-T / small-slab regime: full-T block, amortize across batch.
        tile_t = T
        tile_b = max(1, min(B, target_bytes // max(per_elem, 1)))
    else:
        tile_b = 1
        tile_t = (target_bytes // (C * itemsize)) // 128 * 128
        tile_t = max(tile_t, row_floor)
        if tile_t >= T:
            tile_t = T

    # Make sure both v7x TensorCores get work when the tensor is big enough
    # for the split to matter.
    if _cdiv(B, tile_b) * _cdiv(T, tile_t) == 1 and B * per_elem > (256 << 10):
        if B >= 2:
            tile_b = _cdiv(B, 2)
        elif T >= 256:
            tile_t = max(128, (T // 2) // 128 * 128)
    return tile_b, tile_t


def _vmem_limit(tb: int, C: int, tt: int, itemsize: int, vmem_capacity: int) -> int:
    tile_in = tb * C * tt * itemsize        # input tile (== output tile size)
    tile_f32 = tb * C * tt * 4              # in-kernel f32 intermediates
    limit = 2 * tile_in + 2 * tile_in + 3 * tile_f32 + (1 << 20)
    limit = max(limit, 32 << 20)            # never below the usual default
    cap = int(vmem_capacity * 0.75)         # headroom vs physical VMEM
    return min(limit, cap)


def berp_conv_layer_norm(x_nct, gamma, beta, *, tile_t=None, tile_b=None):
    """x_nct: (B, C, T). gamma, beta: (C,). Returns (B, C, T)."""
    B, C, T = x_nct.shape
    itemsize = x_nct.dtype.itemsize
    vmem_cap = _tpu_vmem_capacity()
    auto_tb, auto_tt = _pick_tiles(B, C, T, itemsize, _target_tile_bytes(vmem_cap))
    tb = tile_b if tile_b is not None else auto_tb
    tt = tile_t if tile_t is not None else auto_tt
    n_b = _cdiv(B, tb)
    n_t = _cdiv(T, tt)

    gamma_1c1 = gamma.astype(jnp.float32).reshape(1, C, 1)
    beta_1c1 = beta.astype(jnp.float32).reshape(1, C, 1)

    return pl.pallas_call(
        _layer_norm_kernel,
        out_shape=jax.ShapeDtypeStruct((B, C, T), x_nct.dtype),
        grid_spec=pltpu.PrefetchScalarGridSpec(
            num_scalar_prefetch=0,
            grid=(n_b, n_t),
            in_specs=[
                pl.BlockSpec((tb, C, tt), lambda b, t: (b, 0, t)),
                pl.BlockSpec((1, C, 1), lambda b, t: (0, 0, 0)),
                pl.BlockSpec((1, C, 1), lambda b, t: (0, 0, 0)),
            ],
            out_specs=pl.BlockSpec((tb, C, tt), lambda b, t: (b, 0, t)),
        ),
        compiler_params=pltpu.CompilerParams(
            dimension_semantics=("parallel", "parallel"),
            vmem_limit_bytes=_vmem_limit(tb, C, tt, itemsize, vmem_cap),
        ),
    )(x_nct, gamma_1c1, beta_1c1)


def _reference(x_nct, gamma, beta):
    x = x_nct.astype(jnp.float32)
    mean = jnp.mean(x, axis=1, keepdims=True)
    var = jnp.mean((x - mean) ** 2, axis=1, keepdims=True)
    y = (x - mean) / jnp.sqrt(var + _EPS)
    y = y * gamma[None, :, None] + beta[None, :, None]
    return y.astype(x_nct.dtype)


if __name__ == "__main__":
    key = jax.random.PRNGKey(0)
    kx1, kx2, kx3, kg, kb, kg3, kb3 = jax.random.split(key, 7)

    # Case 1: module-consistent small shape (2, 32, 16).  Full-T block,
    # batch-blocked (tb == B) so the whole thing is a single fat step.
    B, C, T = 2, 32, 16
    x = jax.random.normal(kx1, (B, C, T), dtype=jnp.float32)
    gamma = 1.0 + 0.1 * jax.random.normal(kg, (C,), dtype=jnp.float32)
    beta = 0.1 * jax.random.normal(kb, (C,), dtype=jnp.float32)
    out = berp_conv_layer_norm(x, gamma, beta)
    jax.block_until_ready(out)
    ref = _reference(x, gamma, beta)
    assert out.shape == (B, C, T)
    assert jnp.allclose(out, ref, atol=1e-4, rtol=1e-4), "mismatch (small shape)"

    # Case 2: tiled-T path with a partial tail block (T=640, tile_t=256 ->
    # blocks of 256/256/128 lanes, masked only on the tail writeback).
    T2 = 640
    x2 = jax.random.normal(kx2, (B, C, T2), dtype=jnp.float32)
    out2 = berp_conv_layer_norm(x2, gamma, beta, tile_t=256, tile_b=1)
    jax.block_until_ready(out2)
    ref2 = _reference(x2, gamma, beta)
    assert out2.shape == (B, C, T2)
    assert jnp.allclose(out2, ref2, atol=1e-4, rtol=1e-4), "mismatch (tiled shape)"

    # Case 3: C not a multiple of the sublane pack (C=20) and T not a
    # multiple of 128 -- checks that the full-extent channel reduce ignores
    # the padded sublanes.
    C3, T3 = 20, 48
    x3 = jax.random.normal(kx3, (B, C3, T3), dtype=jnp.float32)
    gamma3 = 1.0 + 0.1 * jax.random.normal(kg3, (C3,), dtype=jnp.float32)
    beta3 = 0.1 * jax.random.normal(kb3, (C3,), dtype=jnp.float32)
    out3 = berp_conv_layer_norm(x3, gamma3, beta3)
    jax.block_until_ready(out3)
    ref3 = _reference(x3, gamma3, beta3)
    assert out3.shape == (B, C3, T3)
    assert jnp.allclose(out3, ref3, atol=1e-4, rtol=1e-4), "mismatch (odd C)"

    print("KERNEL_OK")
</pallas_src>

<mosaic_0001>
module attributes {stable_mosaic.version = 11 : i64} {
  func.func @_layer_norm_kernel(%arg0: i32, %arg1: i32, %arg2: memref<2x32x16xf32, #tpu.memory_space<vmem>>, %arg3: memref<1x32x1xf32, #tpu.memory_space<vmem>>, %arg4: memref<1x32x1xf32, #tpu.memory_space<vmem>>, %arg5: memref<2x32x16xf32, #tpu.memory_space<vmem>>) attributes {dimension_semantics = [#tpu.dimension_semantics<parallel>, #tpu.dimension_semantics<parallel>], iteration_bounds = array<i64: 1, 1>, scalar_prefetch = 0 : i64, scratch_operands = 0 : i64, tpu.core_type = #tpu.core_type<tc>, window_params = [{transform_indices = @transform_0, window_bounds = array<i64: 2, 32, 16>}, {pipeline_mode = #tpu.pipeline_mode<synchronous>, transform_indices = @transform_1, window_bounds = array<i64: 1, 32, 1>}, {pipeline_mode = #tpu.pipeline_mode<synchronous>, transform_indices = @transform_2, window_bounds = array<i64: 1, 32, 1>}, {transform_indices = @transform_3, window_bounds = array<i64: 2, 32, 16>}]} {
    %c0 = arith.constant 0 : index
    %c0_0 = arith.constant 0 : index
    %c0_1 = arith.constant 0 : index
    %0 = vector.load %arg2[%c0, %c0_0, %c0_1] : memref<2x32x16xf32, #tpu.memory_space<vmem>>, vector<2x32x16xf32>
    %cst = arith.constant dense<0.000000e+00> : vector<2x16xf32>
    %1 = vector.multi_reduction <add>, %0, %cst [1] : vector<2x32x16xf32> to vector<2x16xf32>
    %2 = vector.shape_cast %1 : vector<2x16xf32> to vector<2x1x16xf32>
    %3 = arith.mulf %0, %0 : vector<2x32x16xf32>
    %cst_2 = arith.constant dense<0.000000e+00> : vector<2x16xf32>
    %4 = vector.multi_reduction <add>, %3, %cst_2 [1] : vector<2x32x16xf32> to vector<2x16xf32>
    %5 = vector.shape_cast %4 : vector<2x16xf32> to vector<2x1x16xf32>
    %cst_3 = arith.constant 3.125000e-02 : f32
    %6 = vector.broadcast %cst_3 : f32 to vector<2x1x16xf32>
    %7 = arith.mulf %2, %6 : vector<2x1x16xf32>
    %cst_4 = arith.constant 3.125000e-02 : f32
    %8 = vector.broadcast %cst_4 : f32 to vector<2x1x16xf32>
    %9 = arith.mulf %5, %8 : vector<2x1x16xf32>
    %10 = arith.mulf %7, %7 : vector<2x1x16xf32>
    %11 = arith.subf %9, %10 : vector<2x1x16xf32>
    %cst_5 = arith.constant 0.000000e+00 : f32
    %12 = vector.broadcast %cst_5 : f32 to vector<2x1x16xf32>
    %13 = arith.maximumf %11, %12 : vector<2x1x16xf32>
    %cst_6 = arith.constant 9.99999993E-9 : f32
    %14 = vector.broadcast %cst_6 : f32 to vector<2x1x16xf32>
    %15 = arith.addf %13, %14 : vector<2x1x16xf32>
    %16 = math.rsqrt %15 : vector<2x1x16xf32>
    %17 = vector.broadcast %7 : vector<2x1x16xf32> to vector<2x32x16xf32>
    %18 = arith.subf %0, %17 : vector<2x32x16xf32>
    %19 = vector.broadcast %16 : vector<2x1x16xf32> to vector<2x32x16xf32>
    %20 = arith.mulf %18, %19 : vector<2x32x16xf32>
    %c0_7 = arith.constant 0 : index
    %c0_8 = arith.constant 0 : index
    %c0_9 = arith.constant 0 : index
    %21 = vector.load %arg3[%c0_7, %c0_8, %c0_9] : memref<1x32x1xf32, #tpu.memory_space<vmem>>, vector<1x32x1xf32>
    %22 = vector.broadcast %21 : vector<1x32x1xf32> to vector<2x32x16xf32>
    %23 = arith.mulf %20, %22 : vector<2x32x16xf32>
    %c0_10 = arith.constant 0 : index
    %c0_11 = arith.constant 0 : index
    %c0_12 = arith.constant 0 : index
    %24 = vector.load %arg4[%c0_10, %c0_11, %c0_12] : memref<1x32x1xf32, #tpu.memory_space<vmem>>, vector<1x32x1xf32>
    %25 = vector.broadcast %24 : vector<1x32x1xf32> to vector<2x32x16xf32>
    %26 = arith.addf %23, %25 : vector<2x32x16xf32>
    %c0_13 = arith.constant 0 : index
    %c0_14 = arith.constant 0 : index
    %c0_15 = arith.constant 0 : index
    %27 = vector.load %arg5[%c0_13, %c0_14, %c0_15] : memref<2x32x16xf32, #tpu.memory_space<vmem>>, vector<2x32x16xf32>
    tpu.vector_store %arg5[%c0_13, %c0_14, %c0_15], %26 {strides = array<i32>} : memref<2x32x16xf32, #tpu.memory_space<vmem>>, vector<2x32x16xf32>,
    return
  }
  func.func @transform_0(%arg0: i32, %arg1: i32) -> (i32, i32, i32) {
    %c0_i32 = arith.constant 0 : i32
    %c0_i32_0 = arith.constant 0 : i32
    return %arg0, %c0_i32, %arg1 : i32, i32, i32
  }
  func.func @transform_1(%arg0: i32, %arg1: i32) -> (i32, i32, i32) {
    %c0_i32 = arith.constant 0 : i32
    %c0_i32_0 = arith.constant 0 : i32
    %c0_i32_1 = arith.constant 0 : i32
    %c0_i32_2 = arith.constant 0 : i32
    return %c0_i32, %c0_i32_0, %c0_i32_1 : i32, i32, i32
  }
  func.func @transform_2(%arg0: i32, %arg1: i32) -> (i32, i32, i32) {
    %c0_i32 = arith.constant 0 : i32
    %c0_i32_0 = arith.constant 0 : i32
    %c0_i32_1 = arith.constant 0 : i32
    %c0_i32_2 = arith.constant 0 : i32
    return %c0_i32, %c0_i32_0, %c0_i32_1 : i32, i32, i32
  }
  func.func @transform_3(%arg0: i32, %arg1: i32) -> (i32, i32, i32) {
    %c0_i32 = arith.constant 0 : i32
    %c0_i32_0 = arith.constant 0 : i32
    return %arg0, %c0_i32, %arg1 : i32, i32, i32
  }
}

</mosaic_0001>

<llo_original>
// kernel: tpu_custom_call.1
$region0: #{tpu_custom_call.1}
  #allocation0 [shape = 'u32[]', space=smem, size = 0x4, offset = 0x4, fixed_abs, tag = 'smem constant byte address 0x4 - core index']
  #allocation1 [shape = 'u32[144,128]{1,0:T(1,128)}', space=vmem, size = 0x12000, scoped, tag = 'internal scratch']
  %s0 = inlined_call_operand.vmem [shape: f32[2,32,16], index: 0, kind: input, shape index: {}]
  %s1 = inlined_call_operand.vmem [shape: f32[1,32,1], index: 1, kind: input, shape index: {}]
  %s2 = inlined_call_operand.vmem [shape: f32[1,32,1], index: 2, kind: input, shape index: {}]
  %s3 = inlined_call_operand.vmem [shape: f32[2,32,16], index: 3, kind: output, shape index: {}]
  %s4 = sld [smem:[#allocation0]]
  $region22: #{tpu_custom_call.1} parent=0
    _
  %s6 = ssub.s32 1, %s4
  %s7 = scalar_select 0, %s6, %s4
  // Predicated region
  $region2: #{tpu_custom_call.1} parent=0 // pred_check
    _
  $region3: #{tpu_custom_call.1} parent=0 // pred_check_branch
    %9 = sbr.rel (0) target = $region5
  $region4: #{tpu_custom_call.1} parent=0 // pred_region
    _
  $region5: #{tpu_custom_call.1} parent=0 // pred_fallthru
    _
  // Predicated region
  $region6: #{tpu_custom_call.1} parent=0 // pred_check
    _
  $region7: #{tpu_custom_call.1} parent=0 // pred_check_branch
    %11 = sbr.rel (0) target = $region9
  $region8: #{tpu_custom_call.1} parent=0 // pred_region
    _
  $region9: #{tpu_custom_call.1} parent=0 // pred_fallthru
    _
  // Predicated region
  $region10: #{tpu_custom_call.1} parent=0 // pred_check
    _
  $region11: #{tpu_custom_call.1} parent=0 // pred_check_branch
    %13 = sbr.rel (0) target = $region13
  $region12: #{tpu_custom_call.1} parent=0 // pred_region
    _
  $region13: #{tpu_custom_call.1} parent=0 // pred_fallthru
    _
  %v14 = vld [vmem:[%s0] sm:$0xff]
  %v15 = vld [vmem:[%s0 + $0x8] sm:$0xff]
  %v16 = vld [vmem:[%s0 + $0x10] sm:$0xff]
  %v17 = vld [vmem:[%s0 + $0x18] sm:$0xff]
  %v18 = vld [vmem:[%s0 + $0x20] sm:$0xff]
  %v19 = vld [vmem:[%s0 + $0x28] sm:$0xff]
  %v20 = vld [vmem:[%s0 + $0x30] sm:$0xff]
  %v21 = vld [vmem:[%s0 + $0x38] sm:$0xff]
  %vm22 = vcmask 130048
  %v23 = vsel %vm22, %v14, 0.0
  %v24 = vsel %vm22, %v15, 0.0
  %v25 = vadd.f32 %v23, %v24
  %v26 = vsel %vm22, %v16, 0.0
  %v27 = vadd.f32 %v25, %v26
  %v28 = vsel %vm22, %v17, 0.0
  %v29 = vadd.f32 %v27, %v28
  %v30 = vrot.slane %v29, 4
  %v31 = vadd.f32 %v29, %v30
  %v32 = vrot.slane %v31, 2
  %v33 = vadd.f32 %v31, %v32
  %v34 = vrot.slane %v33, 1
  %v35 = vadd.f32 %v33, %v34
  %v36 = vsel %vm22, %v18, 0.0
  %v37 = vsel %vm22, %v19, 0.0
  %v38 = vadd.f32 %v36, %v37
  %v39 = vsel %vm22, %v20, 0.0
  %v40 = vadd.f32 %v38, %v39
  %v41 = vsel %vm22, %v21, 0.0
  %v42 = vadd.f32 %v40, %v41
  %v43 = vrot.slane %v42, 4
  %v44 = vadd.f32 %v42, %v43
  %v45 = vrot.slane %v44, 2
  %v46 = vadd.f32 %v44, %v45
  %v47 = vrot.slane %v46, 1
  %v48 = vadd.f32 %v46, %v47
  %v49 = vmul.f32 %v14, %v14
  %v50 = vmul.f32 %v15, %v15
  %v51 = vmul.f32 %v16, %v16
  %v52 = vmul.f32 %v17, %v17
  %v53 = vmul.f32 %v18, %v18
  %v54 = vmul.f32 %v19, %v19
  %v55 = vmul.f32 %v20, %v20
  %v56 = vmul.f32 %v21, %v21
  %v57 = vsel %vm22, %v49, 0.0
  %v58 = vsel %vm22, %v50, 0.0
  %v59 = vadd.f32 %v57, %v58
  %v60 = vsel %vm22, %v51, 0.0
  %v61 = vadd.f32 %v59, %v60
  %v62 = vsel %vm22, %v52, 0.0
  %v63 = vadd.f32 %v61, %v62
  %v64 = vrot.slane %v63, 4
  %v65 = vadd.f32 %v63, %v64
  %v66 = vrot.slane %v65, 2
  %v67 = vadd.f32 %v65, %v66
  %v68 = vrot.slane %v67, 1
  %v69 = vadd.f32 %v67, %v68
  %v70 = vsel %vm22, %v53, 0.0
  %v71 = vsel %vm22, %v54, 0.0
  %v72 = vadd.f32 %v70, %v71
  %v73 = vsel %vm22, %v55, 0.0
  %v74 = vadd.f32 %v72, %v73
  %v75 = vsel %vm22, %v56, 0.0
  %v76 = vadd.f32 %v74, %v75
  %v77 = vrot.slane %v76, 4
  %v78 = vadd.f32 %v76, %v77
  %v79 = vrot.slane %v78, 2
  %v80 = vadd.f32 %v78, %v79
  %v81 = vrot.slane %v80, 1
  %v82 = vadd.f32 %v80, %v81
  %v83 = vmul.f32 %v35, 0.03125
  %v84 = vmul.f32 %v48, 0.03125
  %v85 = vmul.f32 %v69, 0.03125
  %v86 = vmul.f32 %v82, 0.03125
  %v87 = vmul.f32 %v83, %v83
  %v88 = vmul.f32 %v84, %v84
  %v89 = vsub.f32 %v85, %v87
  %v90 = vsub.f32 %v86, %v88
  %v91 = vmax.f32 %v89, 0.0
  %v92 = vmax.f32 %v90, 0.0
  %v93 = vadd.f32 %v91, 1e-08
  %v94 = vadd.f32 %v92, 1e-08
  %v95 = vrsqrt.pop %v93
  %v96 = vrsqrt.pop %v94
  %v97 = vsub.f32 %v14, %v83
  %v98 = vsub.f32 %v15, %v83
  %v99 = vsub.f32 %v16, %v83
  %v100 = vsub.f32 %v17, %v83
  %v101 = vsub.f32 %v18, %v84
  %v102 = vsub.f32 %v19, %v84
  %v103 = vsub.f32 %v20, %v84
  %v104 = vsub.f32 %v21, %v84
  %v105 = vmul.f32 %v97, %v95
  %v106 = vmul.f32 %v98, %v95
  %v107 = vmul.f32 %v99, %v95
  %v108 = vmul.f32 %v100, %v95
  %v109 = vmul.f32 %v101, %v96
  %v110 = vmul.f32 %v102, %v96
  %v111 = vmul.f32 %v103, %v96
  %v112 = vmul.f32 %v104, %v96
  %v113 = vld [vmem:[%s1] sm:$0xff]
  %v114 = vld [vmem:[%s1 + $0x8] sm:$0xff]
  %v115 = vld [vmem:[%s1 + $0x10] sm:$0xff]
  %v116 = vld [vmem:[%s1 + $0x18] sm:$0xff]
  %118 = vset.pattern.permute.xlu0 0
  %119 = vperm.xlu0 %118, %v113
  %v120 = vpop.permute.xlu0 %119
  %123 = vset.pattern.permute.xlu0 0
  %124 = vperm.xlu0 %123, %v114
  %v125 = vpop.permute.xlu0 %124
  %128 = vset.pattern.permute.xlu0 0
  %129 = vperm.xlu0 %128, %v115
  %v130 = vpop.permute.xlu0 %129
  %133 = vset.pattern.permute.xlu0 0
  %134 = vperm.xlu0 %133, %v116
  %v135 = vpop.permute.xlu0 %134
  %v137 = vmul.f32 %v105, %v120
  %v138 = vmul.f32 %v106, %v125
  %v139 = vmul.f32 %v107, %v130
  %v140 = vmul.f32 %v108, %v135
  %v141 = vmul.f32 %v109, %v120
  %v142 = vmul.f32 %v110, %v125
  %v143 = vmul.f32 %v111, %v130
  %v144 = vmul.f32 %v112, %v135
  %v145 = vld [vmem:[%s2] sm:$0xff]
  %v146 = vld [vmem:[%s2 + $0x8] sm:$0xff]
  %v147 = vld [vmem:[%s2 + $0x10] sm:$0xff]
  %v148 = vld [vmem:[%s2 + $0x18] sm:$0xff]
  %150 = vset.pattern.permute.xlu0 0
  %151 = vperm.xlu0 %150, %v145
  %v152 = vpop.permute.xlu0 %151
  %155 = vset.pattern.permute.xlu0 0
  %156 = vperm.xlu0 %155, %v146
  %v157 = vpop.permute.xlu0 %156
  %160 = vset.pattern.permute.xlu0 0
  %161 = vperm.xlu0 %160, %v147
  %v162 = vpop.permute.xlu0 %161
  %165 = vset.pattern.permute.xlu0 0
  %166 = vperm.xlu0 %165, %v148
  %v167 = vpop.permute.xlu0 %166
  %v169 = vadd.f32 %v137, %v152
  %v170 = vadd.f32 %v138, %v157
  %v171 = vadd.f32 %v139, %v162
  %v172 = vadd.f32 %v140, %v167
  %v173 = vadd.f32 %v141, %v152
  %v174 = vadd.f32 %v142, %v157
  %v175 = vadd.f32 %v143, %v162
  %v176 = vadd.f32 %v144, %v167
  %177 = vst.msk [vmem:[%s3] sm:$0xff] %vm22, %v169
  %178 = vst.msk [vmem:[%s3 + $0x8] sm:$0xff] %vm22, %v170
  %179 = vst.msk [vmem:[%s3 + $0x10] sm:$0xff] %vm22, %v171
  %180 = vst.msk [vmem:[%s3 + $0x18] sm:$0xff] %vm22, %v172
  %181 = vst.msk [vmem:[%s3 + $0x20] sm:$0xff] %vm22, %v173
  %182 = vst.msk [vmem:[%s3 + $0x28] sm:$0xff] %vm22, %v174
  %183 = vst.msk [vmem:[%s3 + $0x30] sm:$0xff] %vm22, %v175
  %184 = vst.msk [vmem:[%s3 + $0x38] sm:$0xff] %vm22, %v176
  // Predicated region
  $region14: #{tpu_custom_call.1} parent=0 // pred_check
    _
  $region15: #{tpu_custom_call.1} parent=0 // pred_check_branch
    %186 = sbr.rel (0) target = $region17
  $region16: #{tpu_custom_call.1} parent=0 // pred_region
    _
  $region17: #{tpu_custom_call.1} parent=0 // pred_fallthru
    _
  // Predicated region
  $region18: #{tpu_custom_call.1} parent=0 // pred_check
    _
  $region19: #{tpu_custom_call.1} parent=0 // pred_check_branch
    %188 = sbr.rel (0) target = $region21
  $region20: #{tpu_custom_call.1} parent=0 // pred_region
    _
  $region21: #{tpu_custom_call.1} parent=0 // pred_fallthru
    _

</llo_original>
